<compile_context>
chip_gen: v5e
topology: v5e:2x2
jax: 0.10.0
libtpu: 0.0.40
codegen_flags: <defaults>
</compile_context>

<pallas_src>
import functools

import numpy as np
import jax
import jax.numpy as jnp
from jax.experimental import pallas as pl
from jax.experimental.pallas import tpu as pltpu


def _round_up(x, m):
    return ((x + m - 1) // m) * m


def _num_tensorcores():
    """Best-effort TensorCore count (v5e/v6e = 1, v7x = 2); safe fallback = 1."""
    try:
        info = pltpu.get_tpu_info()
        for attr in ("num_cores", "core_count", "num_tensorcores",
                     "tensorcore_count", "cores_per_chip"):
            v = getattr(info, attr, None)
            if isinstance(v, int) and v > 0:
                return v
    except Exception:
        pass
    try:
        v = getattr(jax.devices()[0], "num_cores", None)
        if isinstance(v, int) and v > 0:
            return v
    except Exception:
        pass
    return 1


# ----------------------------- Pallas kernel -------------------------------- #
def _scale_shift_kernel(etype_ref, x_ref, table_ref, o_ref, *, shift_col):
    """etype_ref: (TE, 1) int32; x_ref/o_ref: (TE, D); table_ref: (T2P, WT) f32.

    Table row t (< num_types**2) holds the per-channel scales in lanes [0, D)
    and the per-channel shifts in lanes [shift_col, shift_col + D).
    """
    te, d = x_ref.shape
    t2p = table_ref.shape[0]

    et = etype_ref[...]                                          # (TE, 1) int32
    col = jax.lax.broadcasted_iota(jnp.int32, (te, t2p), 1)      # (TE, T2P)
    onehot = (col == et).astype(jnp.float32)                     # (TE, T2P)
    # NOTE: an out-of-range / negative edge_type yields an all-zero one-hot row
    # and silently produces scale=0 / shift=0; the wrapper only pads with the
    # valid species pair 0.

    # Exact per-edge gather of [scale | shift] rows on the MXU.  HIGHEST keeps
    # the f32 table values bit-exact (no silent bf16 rounding); the matmul runs
    # on the vector-extended slot and overlaps the (binding) DMA.
    ss = jnp.dot(onehot, table_ref[...],
                 preferred_element_type=jnp.float32,
                 precision=jax.lax.Precision.HIGHEST)            # (TE, WT)

    xf = x_ref[...].astype(jnp.float32)
    scale = ss[:, 0:d]
    shift = ss[:, shift_col:shift_col + d]
    o_ref[...] = (scale * xf + shift).astype(o_ref.dtype)


# ------------------------------ kernel wrapper ------------------------------- #
def per_edge_species_scale_shift(x, edge_type, table, shift_col, *, tile_e=None):
    """x: (E, D); edge_type: (E,) int in [0, num_types**2);
    table: (T2P, WT) fused per-(species-pair, channel) scale/shift table."""
    E, D = x.shape
    t2p, wt = table.shape
    itemsize = jnp.dtype(x.dtype).itemsize

    n_cores = _num_tensorcores()
    gran = 8                                    # sublane granularity (edge axis)
    e0 = _round_up(max(int(E), 1), gran)

    if tile_e is None:
        # Larger default on multi-TensorCore chips (v7x: ~3.2 TB/s HBM would
        # make a v6e-sized tile step-overhead bound again).
        tile_e = 32768 if n_cores >= 2 else 16384
    tile = max(gran, min(_round_up(int(tile_e), gran), e0))

    # VMEM budget: double-buffered x/out/etype blocks + onehot/ss temporaries.
    per_edge = 2 * (2 * D * itemsize + 4) + 4 * (t2p + wt)
    max_tile = max(gran, (40 * 1024 * 1024 // max(per_edge, 1)) // gran * gran)
    tile = min(tile, max_tile)

    # Keep >= n_cores grid steps only when the chip really has >1 TensorCore
    # so the ("parallel",) edge axis can shard across cores; single-core chips
    # (v5e/v6e) keep the biggest possible tile (no extra grid-step overhead).
    if n_cores > 1 and e0 >= n_cores * gran:
        tile = min(tile, _round_up(pl.cdiv(e0, n_cores), gran))

    n_blocks = pl.cdiv(e0, tile)
    e_pad = n_blocks * tile
    vmem_limit = int(min(max(per_edge * tile * 5 // 4 + (2 << 20), 32 << 20),
                         48 << 20))

    if e_pad != E:
        x_pad = jnp.pad(x, ((0, e_pad - E), (0, 0)))
        et_pad = jnp.pad(edge_type.astype(jnp.int32), (0, e_pad - E))
    else:
        x_pad = x
        et_pad = edge_type.astype(jnp.int32)
    et2d = et_pad.reshape(e_pad, 1)

    kernel = functools.partial(_scale_shift_kernel, shift_col=shift_col)
    out = pl.pallas_call(
        kernel,
        out_shape=jax.ShapeDtypeStruct((e_pad, D), x.dtype),
        grid_spec=pltpu.PrefetchScalarGridSpec(
            num_scalar_prefetch=0,
            grid=(n_blocks,),
            in_specs=[
                pl.BlockSpec((tile, 1), lambda i: (i, 0)),   # edge species idx
                pl.BlockSpec((tile, D), lambda i: (i, 0)),   # x block (native, HBM-contiguous)
                pl.BlockSpec((t2p, wt), lambda i: (0, 0)),   # fused table (resident)
            ],
            out_specs=pl.BlockSpec((tile, D), lambda i: (i, 0)),
        ),
        compiler_params=pltpu.CompilerParams(
            dimension_semantics=("parallel",),
            vmem_limit_bytes=vmem_limit,
        ),
    )(et2d, x_pad, table)

    return out[:E] if e_pad != E else out


# ----------------------- module-equivalent glue (JAX) ------------------------ #
class E3PerEdgeSpeciesScaleShiftJAX:
    """JAX/Pallas port of E3PerEdgeSpeciesScaleShift.forward.

    irreps_in is given as a list of (mul, (ir_name, ir_dim)), e.g.
    [(4, ("0e", 1)), (2, ("1o", 3)), (1, ("2e", 5))].
    """

    def __init__(self, num_types, irreps_in, scales, shifts):
        self.num_types = num_types
        self.irreps_in = irreps_in

        shift_index, scale_index = [], []
        num_scalar, start, start_scalar = 0, 0, 0
        for mul, (ir_name, ir_dim) in irreps_in:
            if ir_name == "0e":
                num_scalar += mul
                shift_index += list(range(start_scalar, start_scalar + mul))
                start_scalar += mul
            else:
                shift_index += [-1] * (mul * ir_dim)
            for _ in range(mul):
                scale_index += [start] * ir_dim
                start += 1

        self.num_scalar = num_scalar
        self.num_irreps = start
        self.dim = len(scale_index)
        self.shift_index = np.asarray(shift_index, dtype=np.int32)
        self.scale_index = np.asarray(scale_index, dtype=np.int32)

        self.has_scales = scales is not None
        self.has_shifts = shifts is not None

        T2 = num_types * num_types
        D = self.dim
        # expand scales from per-irrep (T2, num_irreps) to per-channel (T2, D)
        if self.has_scales:
            scales = jnp.asarray(scales, dtype=jnp.float32)
            if scales.size == 1:
                scales = jnp.full((T2, self.num_irreps), scales.reshape(()))
            assert scales.shape == (T2, self.num_irreps)
            scales_full = scales[:, self.scale_index]
        else:
            scales_full = jnp.ones((T2, D), dtype=jnp.float32)
        # scatter shifts (T2, num_scalar) into the scalar channels of (T2, D)
        if self.has_shifts:
            shifts = jnp.asarray(shifts, dtype=jnp.float32)
            if shifts.size == 1:
                shifts = jnp.full((T2, self.num_scalar), shifts.reshape(()))
            assert shifts.shape == (T2, self.num_scalar)
            scalar_cols = np.where(self.shift_index >= 0)[0]
            shifts_full = (jnp.zeros((T2, D), dtype=jnp.float32)
                           .at[:, scalar_cols].set(shifts))
        else:
            shifts_full = jnp.zeros((T2, D), dtype=jnp.float32)

        # Fused, untransposed table for the (E, D)-native kernel:
        # cols [0:D) = scales, cols [shift_col : shift_col+D) = shifts.  When
        # 2*D <= 128 both halves share one 128-lane group so the gather is a
        # single one-lane-group MXU matmul; otherwise the shift half starts at
        # a 128-aligned lane offset.
        self.t2p = _round_up(T2, 8)
        self.shift_col = D if 2 * D <= 128 else _round_up(D, 128)
        self.wt = _round_up(self.shift_col + D, 128)
        table = jnp.zeros((self.t2p, self.wt), dtype=jnp.float32)
        table = table.at[:T2, 0:D].set(scales_full)
        table = table.at[:T2, self.shift_col:self.shift_col + D].set(shifts_full)
        self.table = table

    def __call__(self, in_field, edge_type, *, tile_e=None):
        if not (self.has_scales or self.has_shifts):
            return in_field
        return per_edge_species_scale_shift(in_field, edge_type, self.table,
                                            self.shift_col, tile_e=tile_e)


# --------------------------------- main -------------------------------------- #
if __name__ == "__main__":
    key = jax.random.PRNGKey(0)
    k1, k2, k3, k4 = jax.random.split(key, 4)

    # irreps_in = "4x0e + 2x1o + 1x2e" -> dim = 4 + 6 + 5 = 15, num_irreps = 7,
    # num_scalar = 4
    irreps_in = [(4, ("0e", 1)), (2, ("1o", 3)), (1, ("2e", 5))]
    num_types = 3
    T2 = num_types * num_types
    E = 128                                   # number of edges
    num_irreps = 7
    num_scalar = 4
    D = 15

    x = jax.random.normal(k1, (E, D), dtype=jnp.float32)
    edge_type = jax.random.randint(k2, (E,), 0, T2, dtype=jnp.int32)
    scales = 1.0 + 0.1 * jax.random.normal(k3, (T2, num_irreps), dtype=jnp.float32)
    shifts = 0.5 * jax.random.normal(k4, (T2, num_scalar), dtype=jnp.float32)

    mod = E3PerEdgeSpeciesScaleShiftJAX(num_types, irreps_in, scales, shifts)
    out = mod(x, edge_type)
    out = jax.block_until_ready(out)

    # pure-JAX reference mirroring the PyTorch forward
    scales_exp = scales[edge_type][:, mod.scale_index]            # (E, D)
    ref = scales_exp * x
    scalar_cols = np.where(mod.shift_index >= 0)[0]
    ref = ref.at[:, scalar_cols].set(shifts[edge_type] + ref[:, scalar_cols])

    np.testing.assert_allclose(np.asarray(out), np.asarray(ref), rtol=1e-5, atol=1e-5)
    print("KERNEL_OK")
</pallas_src>

<mosaic_0001>
module attributes {stable_mosaic.version = 11 : i64} {
  func.func @_scale_shift_kernel(%arg0: i32, %arg1: memref<128x1xi32, #tpu.memory_space<vmem>>, %arg2: memref<128x15xf32, #tpu.memory_space<vmem>>, %arg3: memref<16x128xf32, #tpu.memory_space<vmem>>, %arg4: memref<128x15xf32, #tpu.memory_space<vmem>>) attributes {dimension_semantics = [#tpu.dimension_semantics<parallel>], iteration_bounds = array<i64: 1>, scalar_prefetch = 0 : i64, scratch_operands = 0 : i64, tpu.core_type = #tpu.core_type<tc>, window_params = [{transform_indices = @transform_0, window_bounds = array<i64: 128, 1>}, {transform_indices = @transform_1, window_bounds = array<i64: 128, 15>}, {pipeline_mode = #tpu.pipeline_mode<synchronous>, transform_indices = @transform_2, window_bounds = array<i64: 16, 128>}, {transform_indices = @transform_3, window_bounds = array<i64: 128, 15>}]} {
    %c0 = arith.constant 0 : index
    %c0_0 = arith.constant 0 : index
    %0 = vector.load %arg1[%c0, %c0_0] : memref<128x1xi32, #tpu.memory_space<vmem>>, vector<128x1xi32>
    %1 = tpu.iota {dimensions = array<i32: 1>} : vector<128x16xi32>
    %2 = vector.broadcast %0 : vector<128x1xi32> to vector<128x16xi32>
    %3 = arith.cmpi eq, %1, %2 : vector<128x16xi32>
    %4 = arith.extui %3 : vector<128x16xi1> to vector<128x16xi32>
    %5 = arith.sitofp %4 : vector<128x16xi32> to vector<128x16xf32>
    %c0_1 = arith.constant 0 : index
    %c0_2 = arith.constant 0 : index
    %6 = vector.load %arg3[%c0_1, %c0_2] : memref<16x128xf32, #tpu.memory_space<vmem>>, vector<16x128xf32>
    %cst = arith.constant dense<0.000000e+00> : vector<128x128xf32>
    %7 = tpu.matmul %5, %6, %cst {dimension_numbers = #tpu.dot_dimension_numbers<[1], [0], [0], [1], [0, 0, 1, 1], [], []>, precision = #tpu.contract_precision<fp32>} : vector<128x16xf32>, vector<16x128xf32>, vector<128x128xf32> -> vector<128x128xf32>
    %c0_3 = arith.constant 0 : index
    %c0_4 = arith.constant 0 : index
    %8 = vector.load %arg2[%c0_3, %c0_4] : memref<128x15xf32, #tpu.memory_space<vmem>>, vector<128x15xf32>
    %9 = vector.extract_strided_slice %7 {offsets = [0, 0], sizes = [128, 15], strides = [1, 1]} : vector<128x128xf32> to vector<128x15xf32>
    %10 = vector.extract_strided_slice %7 {offsets = [0, 15], sizes = [128, 15], strides = [1, 1]} : vector<128x128xf32> to vector<128x15xf32>
    %11 = arith.mulf %9, %8 : vector<128x15xf32>
    %12 = arith.addf %11, %10 : vector<128x15xf32>
    %c0_5 = arith.constant 0 : index
    %c0_6 = arith.constant 0 : index
    %13 = vector.load %arg4[%c0_5, %c0_6] : memref<128x15xf32, #tpu.memory_space<vmem>>, vector<128x15xf32>
    tpu.vector_store %arg4[%c0_5, %c0_6], %12 {strides = array<i32>} : memref<128x15xf32, #tpu.memory_space<vmem>>, vector<128x15xf32>,
    return
  }
  func.func @transform_0(%arg0: i32) -> (i32, i32) {
    %c0_i32 = arith.constant 0 : i32
    %c0_i32_0 = arith.constant 0 : i32
    return %arg0, %c0_i32 : i32, i32
  }
  func.func @transform_1(%arg0: i32) -> (i32, i32) {
    %c0_i32 = arith.constant 0 : i32
    %c0_i32_0 = arith.constant 0 : i32
    return %arg0, %c0_i32 : i32, i32
  }
  func.func @transform_2(%arg0: i32) -> (i32, i32) {
    %c0_i32 = arith.constant 0 : i32
    %c0_i32_0 = arith.constant 0 : i32
    %c0_i32_1 = arith.constant 0 : i32
    return %c0_i32, %c0_i32_0 : i32, i32
  }
  func.func @transform_3(%arg0: i32) -> (i32, i32) {
    %c0_i32 = arith.constant 0 : i32
    %c0_i32_0 = arith.constant 0 : i32
    return %arg0, %c0_i32 : i32, i32
  }
}

</mosaic_0001>

<llo_original>
// kernel: tpu_custom_call.1
$region0: #{tpu_custom_call.1}
  #allocation0 [shape = 'u32[]', space=smem, size = 0x4, offset = 0x4, fixed_abs, tag = 'smem constant byte address 0x4 - core index']
  #allocation1 [shape = 'u32[72,128]{1,0:T(1,128)}', space=vmem, size = 0x9000, scoped, tag = 'internal scratch']
  %s0 = inlined_call_operand.vmem [shape: s32[128,1], index: 0, kind: input, shape index: {}]
  %s1 = inlined_call_operand.vmem [shape: f32[128,15], index: 1, kind: input, shape index: {}]
  %s2 = inlined_call_operand.vmem [shape: f32[16,128], index: 2, kind: input, shape index: {}]
  %s3 = inlined_call_operand.vmem [shape: f32[128,15], index: 3, kind: output, shape index: {}]
  %s4 = sld [smem:[#allocation0]]
  $region22: #{tpu_custom_call.1} parent=0
    _
  %s6 = ssub.s32 1, %s4
  %s7 = scalar_select 0, %s6, %s4
  // Predicated region
  $region2: #{tpu_custom_call.1} parent=0 // pred_check
    _
  $region3: #{tpu_custom_call.1} parent=0 // pred_check_branch
    %9 = sbr.rel (0) target = $region5
  $region4: #{tpu_custom_call.1} parent=0 // pred_region
    _
  $region5: #{tpu_custom_call.1} parent=0 // pred_fallthru
    _
  // Predicated region
  $region6: #{tpu_custom_call.1} parent=0 // pred_check
    _
  $region7: #{tpu_custom_call.1} parent=0 // pred_check_branch
    %11 = sbr.rel (0) target = $region9
  $region8: #{tpu_custom_call.1} parent=0 // pred_region
    _
  $region9: #{tpu_custom_call.1} parent=0 // pred_fallthru
    _
  // Predicated region
  $region10: #{tpu_custom_call.1} parent=0 // pred_check
    _
  $region11: #{tpu_custom_call.1} parent=0 // pred_check_branch
    %13 = sbr.rel (0) target = $region13
  $region12: #{tpu_custom_call.1} parent=0 // pred_region
    _
  $region13: #{tpu_custom_call.1} parent=0 // pred_fallthru
    _
  %v14 = vld [vmem:[%s0] sm:$0xff]
  %v15 = vld [vmem:[%s0 + $0x8] sm:$0xff]
  %v16 = vld [vmem:[%s0 + $0x10] sm:$0xff]
  %v17 = vld [vmem:[%s0 + $0x18] sm:$0xff]
  %v18 = vld [vmem:[%s0 + $0x20] sm:$0xff]
  %v19 = vld [vmem:[%s0 + $0x28] sm:$0xff]
  %v20 = vld [vmem:[%s0 + $0x30] sm:$0xff]
  %v21 = vld [vmem:[%s0 + $0x38] sm:$0xff]
  %v22 = vld [vmem:[%s0 + $0x40] sm:$0xff]
  %v23 = vld [vmem:[%s0 + $0x48] sm:$0xff]
  %v24 = vld [vmem:[%s0 + $0x50] sm:$0xff]
  %v25 = vld [vmem:[%s0 + $0x58] sm:$0xff]
  %v26 = vld [vmem:[%s0 + $0x60] sm:$0xff]
  %v27 = vld [vmem:[%s0 + $0x68] sm:$0xff]
  %v28 = vld [vmem:[%s0 + $0x70] sm:$0xff]
  %v29 = vld [vmem:[%s0 + $0x78] sm:$0xff]
  %v30 = vlaneseq
  %v31 = vand.u32 %v30, 127
  %32 = vset.pattern.permute.xlu0 0
  %33 = vperm.xlu0 %32, %v14
  %v34 = vpop.permute.xlu0 %33
  %35 = vset.pattern.permute.xlu0 0
  %36 = vperm.xlu0 %35, %v15
  %v37 = vpop.permute.xlu0 %36
  %38 = vset.pattern.permute.xlu0 0
  %39 = vperm.xlu0 %38, %v16
  %v40 = vpop.permute.xlu0 %39
  %41 = vset.pattern.permute.xlu0 0
  %42 = vperm.xlu0 %41, %v17
  %v43 = vpop.permute.xlu0 %42
  %44 = vset.pattern.permute.xlu0 0
  %45 = vperm.xlu0 %44, %v18
  %v46 = vpop.permute.xlu0 %45
  %47 = vset.pattern.permute.xlu0 0
  %48 = vperm.xlu0 %47, %v19
  %v49 = vpop.permute.xlu0 %48
  %50 = vset.pattern.permute.xlu0 0
  %51 = vperm.xlu0 %50, %v20
  %v52 = vpop.permute.xlu0 %51
  %53 = vset.pattern.permute.xlu0 0
  %54 = vperm.xlu0 %53, %v21
  %v55 = vpop.permute.xlu0 %54
  %56 = vset.pattern.permute.xlu0 0
  %57 = vperm.xlu0 %56, %v22
  %v58 = vpop.permute.xlu0 %57
  %59 = vset.pattern.permute.xlu0 0
  %60 = vperm.xlu0 %59, %v23
  %v61 = vpop.permute.xlu0 %60
  %62 = vset.pattern.permute.xlu0 0
  %63 = vperm.xlu0 %62, %v24
  %v64 = vpop.permute.xlu0 %63
  %65 = vset.pattern.permute.xlu0 0
  %66 = vperm.xlu0 %65, %v25
  %v67 = vpop.permute.xlu0 %66
  %68 = vset.pattern.permute.xlu0 0
  %69 = vperm.xlu0 %68, %v26
  %v70 = vpop.permute.xlu0 %69
  %71 = vset.pattern.permute.xlu0 0
  %72 = vperm.xlu0 %71, %v27
  %v73 = vpop.permute.xlu0 %72
  %74 = vset.pattern.permute.xlu0 0
  %75 = vperm.xlu0 %74, %v28
  %v76 = vpop.permute.xlu0 %75
  %77 = vset.pattern.permute.xlu0 0
  %78 = vperm.xlu0 %77, %v29
  %v79 = vpop.permute.xlu0 %78
  %vm80 = vcmp.eq.s32.totalorder %v31, %v34
  %vm81 = vcmp.eq.s32.totalorder %v31, %v37
  %vm82 = vcmp.eq.s32.totalorder %v31, %v40
  %vm83 = vcmp.eq.s32.totalorder %v31, %v43
  %vm84 = vcmp.eq.s32.totalorder %v31, %v46
  %vm85 = vcmp.eq.s32.totalorder %v31, %v49
  %vm86 = vcmp.eq.s32.totalorder %v31, %v52
  %vm87 = vcmp.eq.s32.totalorder %v31, %v55
  %vm88 = vcmp.eq.s32.totalorder %v31, %v58
  %vm89 = vcmp.eq.s32.totalorder %v31, %v61
  %vm90 = vcmp.eq.s32.totalorder %v31, %v64
  %vm91 = vcmp.eq.s32.totalorder %v31, %v67
  %vm92 = vcmp.eq.s32.totalorder %v31, %v70
  %vm93 = vcmp.eq.s32.totalorder %v31, %v73
  %vm94 = vcmp.eq.s32.totalorder %v31, %v76
  %vm95 = vcmp.eq.s32.totalorder %v31, %v79
  %v96 = vsel %vm80, 1, 0
  %v97 = vsel %vm81, 1, 0
  %v98 = vsel %vm82, 1, 0
  %v99 = vsel %vm83, 1, 0
  %v100 = vsel %vm84, 1, 0
  %v101 = vsel %vm85, 1, 0
  %v102 = vsel %vm86, 1, 0
  %v103 = vsel %vm87, 1, 0
  %v104 = vsel %vm88, 1, 0
  %v105 = vsel %vm89, 1, 0
  %v106 = vsel %vm90, 1, 0
  %v107 = vsel %vm91, 1, 0
  %v108 = vsel %vm92, 1, 0
  %v109 = vsel %vm93, 1, 0
  %v110 = vsel %vm94, 1, 0
  %v111 = vsel %vm95, 1, 0
  %v112 = vcvt.s32.f32 %v96
  %v113 = vcvt.s32.f32 %v97
  %v114 = vcvt.s32.f32 %v98
  %v115 = vcvt.s32.f32 %v99
  %v116 = vcvt.s32.f32 %v100
  %v117 = vcvt.s32.f32 %v101
  %v118 = vcvt.s32.f32 %v102
  %v119 = vcvt.s32.f32 %v103
  %v120 = vcvt.s32.f32 %v104
  %v121 = vcvt.s32.f32 %v105
  %v122 = vcvt.s32.f32 %v106
  %v123 = vcvt.s32.f32 %v107
  %v124 = vcvt.s32.f32 %v108
  %v125 = vcvt.s32.f32 %v109
  %v126 = vcvt.s32.f32 %v110
  %v127 = vcvt.s32.f32 %v111
  %v128 = vld [vmem:[%s2] sm:$0xff]
  %v129 = vld [vmem:[%s2 + $0x8] sm:$0xff]
  %vm130 = vcmask 130048
  %v132 = vsel %vm130, %v112, 0
  %v135 = vsel %vm130, %v113, 0
  %v138 = vsel %vm130, %v114, 0
  %v141 = vsel %vm130, %v115, 0
  %v144 = vsel %vm130, %v116, 0
  %v147 = vsel %vm130, %v117, 0
  %v150 = vsel %vm130, %v118, 0
  %v153 = vsel %vm130, %v119, 0
  %v156 = vsel %vm130, %v120, 0
  %v159 = vsel %vm130, %v121, 0
  %v162 = vsel %vm130, %v122, 0
  %v165 = vsel %vm130, %v123, 0
  %v168 = vsel %vm130, %v124, 0
  %v171 = vsel %vm130, %v125, 0
  %v174 = vsel %vm130, %v126, 0
  %v177 = vsel %vm130, %v127, 0
  %179 = vmatpush.msra.mxu0 0.0
  %180 = vmatpush.msra.mxu0 0.0
  %181 = vmatpush.msra.mxu0 0.0
  %182 = vmatpush.msra.mxu0 0.0
  %183 = vmatpush.msra.mxu0 0.0
  %184 = vmatpush.msra.mxu0 0.0
  %185 = vmatpush.msra.mxu0 0.0
  %186 = vmatpush.msra.mxu0 0.0
  %187 = vmatpush.msra.mxu0 0.0
  %188 = vmatpush.msra.mxu0 0.0
  %189 = vmatpush.msra.mxu0 0.0
  %190 = vmatpush.msra.mxu0 0.0
  %191 = vmatpush.msra.mxu0 0.0
  %192 = vmatpush.msra.mxu0 0.0
  %v193 = vand.u32 %v129, 4294901760
  %194 = vmatpush.msra.mxu0 %v193
  %v195 = vand.u32 %v128, 4294901760
  %196 = vmatpush.msra.mxu0 %v195
  %v197 = vand.u32 %v132, 4294901760
  %v198 = vsub.f32 %v132, %v197
  %v199 = vand.u32 %v198, 4294901760
  %v200 = vsub.f32 %v198, %v199
  %v201 = vand.u32 %v200, 4294901760
  %202 = vmatmul.f32.gmra.mxu0 %v201
  %v203 = vpop.f32.mrf.mxu0
  %v204 = vadd.f32 0.0, %v203
  %v205 = vand.u32 %v135, 4294901760
  %v206 = vsub.f32 %v135, %v205
  %v207 = vand.u32 %v206, 4294901760
  %v208 = vsub.f32 %v206, %v207
  %v209 = vand.u32 %v208, 4294901760
  %210 = vmatmul.f32.gmra.mxu0 %v209
  %v211 = vpop.f32.mrf.mxu0
  %v212 = vadd.f32 0.0, %v211
  %v213 = vand.u32 %v138, 4294901760
  %v214 = vsub.f32 %v138, %v213
  %v215 = vand.u32 %v214, 4294901760
  %v216 = vsub.f32 %v214, %v215
  %v217 = vand.u32 %v216, 4294901760
  %218 = vmatmul.f32.gmra.mxu0 %v217
  %v219 = vpop.f32.mrf.mxu0
  %v220 = vadd.f32 0.0, %v219
  %v221 = vand.u32 %v141, 4294901760
  %v222 = vsub.f32 %v141, %v221
  %v223 = vand.u32 %v222, 4294901760
  %v224 = vsub.f32 %v222, %v223
  %v225 = vand.u32 %v224, 4294901760
  %226 = vmatmul.f32.gmra.mxu0 %v225
  %v227 = vpop.f32.mrf.mxu0
  %v228 = vadd.f32 0.0, %v227
  %v229 = vand.u32 %v144, 4294901760
  %v230 = vsub.f32 %v144, %v229
  %v231 = vand.u32 %v230, 4294901760
  %v232 = vsub.f32 %v230, %v231
  %v233 = vand.u32 %v232, 4294901760
  %234 = vmatmul.f32.gmra.mxu0 %v233
  %v235 = vpop.f32.mrf.mxu0
  %v236 = vadd.f32 0.0, %v235
  %v237 = vand.u32 %v147, 4294901760
  %v238 = vsub.f32 %v147, %v237
  %v239 = vand.u32 %v238, 4294901760
  %v240 = vsub.f32 %v238, %v239
  %v241 = vand.u32 %v240, 4294901760
  %242 = vmatmul.f32.gmra.mxu0 %v241
  %v243 = vpop.f32.mrf.mxu0
  %v244 = vadd.f32 0.0, %v243
  %v245 = vand.u32 %v150, 4294901760
  %v246 = vsub.f32 %v150, %v245
  %v247 = vand.u32 %v246, 4294901760
  %v248 = vsub.f32 %v246, %v247
  %v249 = vand.u32 %v248, 4294901760
  %250 = vmatmul.f32.gmra.mxu0 %v249
  %v251 = vpop.f32.mrf.mxu0
  %v252 = vadd.f32 0.0, %v251
  %v253 = vand.u32 %v153, 4294901760
  %v254 = vsub.f32 %v153, %v253
  %v255 = vand.u32 %v254, 4294901760
  %v256 = vsub.f32 %v254, %v255
  %v257 = vand.u32 %v256, 4294901760
  %258 = vmatmul.f32.gmra.mxu0 %v257
  %v259 = vpop.f32.mrf.mxu0
  %v260 = vadd.f32 0.0, %v259
  %v261 = vand.u32 %v156, 4294901760
  %v262 = vsub.f32 %v156, %v261
  %v263 = vand.u32 %v262, 4294901760
  %v264 = vsub.f32 %v262, %v263
  %v265 = vand.u32 %v264, 4294901760
  %266 = vmatmul.f32.gmra.mxu0 %v265
  %v267 = vpop.f32.mrf.mxu0
  %v268 = vadd.f32 0.0, %v267
  %v269 = vand.u32 %v159, 4294901760
  %v270 = vsub.f32 %v159, %v269
  %v271 = vand.u32 %v270, 4294901760
  %v272 = vsub.f32 %v270, %v271
  %v273 = vand.u32 %v272, 4294901760
  %274 = vmatmul.f32.gmra.mxu0 %v273
  %v275 = vpop.f32.mrf.mxu0
  %v276 = vadd.f32 0.0, %v275
  %v277 = vand.u32 %v162, 4294901760
  %v278 = vsub.f32 %v162, %v277
  %v279 = vand.u32 %v278, 4294901760
  %v280 = vsub.f32 %v278, %v279
  %v281 = vand.u32 %v280, 4294901760
  %282 = vmatmul.f32.gmra.mxu0 %v281
  %v283 = vpop.f32.mrf.mxu0
  %v284 = vadd.f32 0.0, %v283
  %v285 = vand.u32 %v165, 4294901760
  %v286 = vsub.f32 %v165, %v285
  %v287 = vand.u32 %v286, 4294901760
  %v288 = vsub.f32 %v286, %v287
  %v289 = vand.u32 %v288, 4294901760
  %290 = vmatmul.f32.gmra.mxu0 %v289
  %v291 = vpop.f32.mrf.mxu0
  %v292 = vadd.f32 0.0, %v291
  %v293 = vand.u32 %v168, 4294901760
  %v294 = vsub.f32 %v168, %v293
  %v295 = vand.u32 %v294, 4294901760
  %v296 = vsub.f32 %v294, %v295
  %v297 = vand.u32 %v296, 4294901760
  %298 = vmatmul.f32.gmra.mxu0 %v297
  %v299 = vpop.f32.mrf.mxu0
  %v300 = vadd.f32 0.0, %v299
  %v301 = vand.u32 %v171, 4294901760
  %v302 = vsub.f32 %v171, %v301
  %v303 = vand.u32 %v302, 4294901760
  %v304 = vsub.f32 %v302, %v303
  %v305 = vand.u32 %v304, 4294901760
  %306 = vmatmul.f32.gmra.mxu0 %v305
  %v307 = vpop.f32.mrf.mxu0
  %v308 = vadd.f32 0.0, %v307
  %v309 = vand.u32 %v174, 4294901760
  %v310 = vsub.f32 %v174, %v309
  %v311 = vand.u32 %v310, 4294901760
  %v312 = vsub.f32 %v310, %v311
  %v313 = vand.u32 %v312, 4294901760
  %314 = vmatmul.f32.gmra.mxu0 %v313
  %v315 = vpop.f32.mrf.mxu0
  %v316 = vadd.f32 0.0, %v315
  %v317 = vand.u32 %v177, 4294901760
  %v318 = vsub.f32 %v177, %v317
  %v319 = vand.u32 %v318, 4294901760
  %v320 = vsub.f32 %v318, %v319
  %v321 = vand.u32 %v320, 4294901760
  %322 = vmatmul.f32.gmra.mxu0 %v321
  %v323 = vpop.f32.mrf.mxu0
  %v324 = vadd.f32 0.0, %v323
  %325 = vdwg.mxu0
  %326 = vmatpush.msra.mxu0 0.0
  %327 = vmatpush.msra.mxu0 0.0
  %328 = vmatpush.msra.mxu0 0.0
  %329 = vmatpush.msra.mxu0 0.0
  %330 = vmatpush.msra.mxu0 0.0
  %331 = vmatpush.msra.mxu0 0.0
  %332 = vmatpush.msra.mxu0 0.0
  %333 = vmatpush.msra.mxu0 0.0
  %334 = vmatpush.msra.mxu0 0.0
  %335 = vmatpush.msra.mxu0 0.0
  %336 = vmatpush.msra.mxu0 0.0
  %337 = vmatpush.msra.mxu0 0.0
  %338 = vmatpush.msra.mxu0 0.0
  %339 = vmatpush.msra.mxu0 0.0
  %v340 = vand.u32 %v129, 4294901760
  %v341 = vsub.f32 %v129, %v340
  %v342 = vand.u32 %v341, 4294901760
  %v343 = vsub.f32 %v341, %v342
  %v344 = vand.u32 %v343, 4294901760
  %345 = vmatpush.msra.mxu0 %v344
  %v346 = vand.u32 %v128, 4294901760
  %v347 = vsub.f32 %v128, %v346
  %v348 = vand.u32 %v347, 4294901760
  %v349 = vsub.f32 %v347, %v348
  %v350 = vand.u32 %v349, 4294901760
  %351 = vmatpush.msra.mxu0 %v350
  %v352 = vand.u32 %v132, 4294901760
  %353 = vmatmul.f32.gmra.mxu0 %v352
  %v354 = vpop.f32.mrf.mxu0
  %v355 = vadd.f32 %v204, %v354
  %v356 = vand.u32 %v135, 4294901760
  %357 = vmatmul.f32.gmra.mxu0 %v356
  %v358 = vpop.f32.mrf.mxu0
  %v359 = vadd.f32 %v212, %v358
  %v360 = vand.u32 %v138, 4294901760
  %361 = vmatmul.f32.gmra.mxu0 %v360
  %v362 = vpop.f32.mrf.mxu0
  %v363 = vadd.f32 %v220, %v362
  %v364 = vand.u32 %v141, 4294901760
  %365 = vmatmul.f32.gmra.mxu0 %v364
  %v366 = vpop.f32.mrf.mxu0
  %v367 = vadd.f32 %v228, %v366
  %v368 = vand.u32 %v144, 4294901760
  %369 = vmatmul.f32.gmra.mxu0 %v368
  %v370 = vpop.f32.mrf.mxu0
  %v371 = vadd.f32 %v236, %v370
  %v372 = vand.u32 %v147, 4294901760
  %373 = vmatmul.f32.gmra.mxu0 %v372
  %v374 = vpop.f32.mrf.mxu0
  %v375 = vadd.f32 %v244, %v374
  %v376 = vand.u32 %v150, 4294901760
  %377 = vmatmul.f32.gmra.mxu0 %v376
  %v378 = vpop.f32.mrf.mxu0
  %v379 = vadd.f32 %v252, %v378
  %v380 = vand.u32 %v153, 4294901760
  %381 = vmatmul.f32.gmra.mxu0 %v380
  %v382 = vpop.f32.mrf.mxu0
  %v383 = vadd.f32 %v260, %v382
  %v384 = vand.u32 %v156, 4294901760
  %385 = vmatmul.f32.gmra.mxu0 %v384
  %v386 = vpop.f32.mrf.mxu0
  %v387 = vadd.f32 %v268, %v386
  %v388 = vand.u32 %v159, 4294901760
  %389 = vmatmul.f32.gmra.mxu0 %v388
  %v390 = vpop.f32.mrf.mxu0
  %v391 = vadd.f32 %v276, %v390
  %v392 = vand.u32 %v162, 4294901760
  %393 = vmatmul.f32.gmra.mxu0 %v392
  %v394 = vpop.f32.mrf.mxu0
  %v395 = vadd.f32 %v284, %v394
  %v396 = vand.u32 %v165, 4294901760
  %397 = vmatmul.f32.gmra.mxu0 %v396
  %v398 = vpop.f32.mrf.mxu0
  %v399 = vadd.f32 %v292, %v398
  %v400 = vand.u32 %v168, 4294901760
  %401 = vmatmul.f32.gmra.mxu0 %v400
  %v402 = vpop.f32.mrf.mxu0
  %v403 = vadd.f32 %v300, %v402
  %v404 = vand.u32 %v171, 4294901760
  %405 = vmatmul.f32.gmra.mxu0 %v404
  %v406 = vpop.f32.mrf.mxu0
  %v407 = vadd.f32 %v308, %v406
  %v408 = vand.u32 %v174, 4294901760
  %409 = vmatmul.f32.gmra.mxu0 %v408
  %v410 = vpop.f32.mrf.mxu0
  %v411 = vadd.f32 %v316, %v410
  %v412 = vand.u32 %v177, 4294901760
  %413 = vmatmul.f32.gmra.mxu0 %v412
  %v414 = vpop.f32.mrf.mxu0
  %v415 = vadd.f32 %v324, %v414
  %416 = vdwg.mxu0
  %417 = vmatpush.msra.mxu0 0.0
  %418 = vmatpush.msra.mxu0 0.0
  %419 = vmatpush.msra.mxu0 0.0
  %420 = vmatpush.msra.mxu0 0.0
  %421 = vmatpush.msra.mxu0 0.0
  %422 = vmatpush.msra.mxu0 0.0
  %423 = vmatpush.msra.mxu0 0.0
  %424 = vmatpush.msra.mxu0 0.0
  %425 = vmatpush.msra.mxu0 0.0
  %426 = vmatpush.msra.mxu0 0.0
  %427 = vmatpush.msra.mxu0 0.0
  %428 = vmatpush.msra.mxu0 0.0
  %429 = vmatpush.msra.mxu0 0.0
  %430 = vmatpush.msra.mxu0 0.0
  %v431 = vand.u32 %v129, 4294901760
  %v432 = vsub.f32 %v129, %v431
  %433 = vmatpush.msra.mxu0 %v432
  %v434 = vand.u32 %v128, 4294901760
  %v435 = vsub.f32 %v128, %v434
  %436 = vmatpush.msra.mxu0 %v435
  %v437 = vand.u32 %v132, 4294901760
  %v438 = vsub.f32 %v132, %v437
  %439 = vmatmul.f32.gmra.mxu0 %v438
  %v440 = vpop.f32.mrf.mxu0
  %v441 = vadd.f32 %v355, %v440
  %v442 = vand.u32 %v135, 4294901760
  %v443 = vsub.f32 %v135, %v442
  %444 = vmatmul.f32.gmra.mxu0 %v443
  %v445 = vpop.f32.mrf.mxu0
  %v446 = vadd.f32 %v359, %v445
  %v447 = vand.u32 %v138, 4294901760
  %v448 = vsub.f32 %v138, %v447
  %449 = vmatmul.f32.gmra.mxu0 %v448
  %v450 = vpop.f32.mrf.mxu0
  %v451 = vadd.f32 %v363, %v450
  %v452 = vand.u32 %v141, 4294901760
  %v453 = vsub.f32 %v141, %v452
  %454 = vmatmul.f32.gmra.mxu0 %v453
  %v455 = vpop.f32.mrf.mxu0
  %v456 = vadd.f32 %v367, %v455
  %v457 = vand.u32 %v144, 4294901760
  %v458 = vsub.f32 %v144, %v457
  %459 = vmatmul.f32.gmra.mxu0 %v458
  %v460 = vpop.f32.mrf.mxu0
  %v461 = vadd.f32 %v371, %v460
  %v462 = vand.u32 %v147, 4294901760
  %v463 = vsub.f32 %v147, %v462
  %464 = vmatmul.f32.gmra.mxu0 %v463
  %v465 = vpop.f32.mrf.mxu0
  %v466 = vadd.f32 %v375, %v465
  %v467 = vand.u32 %v150, 4294901760
  %v468 = vsub.f32 %v150, %v467
  %469 = vmatmul.f32.gmra.mxu0 %v468
  %v470 = vpop.f32.mrf.mxu0
  %v471 = vadd.f32 %v379, %v470
  %v472 = vand.u32 %v153, 4294901760
  %v473 = vsub.f32 %v153, %v472
  %474 = vmatmul.f32.gmra.mxu0 %v473
  %v475 = vpop.f32.mrf.mxu0
  %v476 = vadd.f32 %v383, %v475
  %v477 = vand.u32 %v156, 4294901760
  %v478 = vsub.f32 %v156, %v477
  %479 = vmatmul.f32.gmra.mxu0 %v478
  %v480 = vpop.f32.mrf.mxu0
  %v481 = vadd.f32 %v387, %v480
  %v482 = vand.u32 %v159, 4294901760
  %v483 = vsub.f32 %v159, %v482
  %484 = vmatmul.f32.gmra.mxu0 %v483
  %v485 = vpop.f32.mrf.mxu0
  %v486 = vadd.f32 %v391, %v485
  %v487 = vand.u32 %v162, 4294901760
  %v488 = vsub.f32 %v162, %v487
  %489 = vmatmul.f32.gmra.mxu0 %v488
  %v490 = vpop.f32.mrf.mxu0
  %v491 = vadd.f32 %v395, %v490
  %v492 = vand.u32 %v165, 4294901760
  %v493 = vsub.f32 %v165, %v492
  %494 = vmatmul.f32.gmra.mxu0 %v493
  %v495 = vpop.f32.mrf.mxu0
  %v496 = vadd.f32 %v399, %v495
  %v497 = vand.u32 %v168, 4294901760
  %v498 = vsub.f32 %v168, %v497
  %499 = vmatmul.f32.gmra.mxu0 %v498
  %v500 = vpop.f32.mrf.mxu0
  %v501 = vadd.f32 %v403, %v500
  %v502 = vand.u32 %v171, 4294901760
  %v503 = vsub.f32 %v171, %v502
  %504 = vmatmul.f32.gmra.mxu0 %v503
  %v505 = vpop.f32.mrf.mxu0
  %v506 = vadd.f32 %v407, %v505
  %v507 = vand.u32 %v174, 4294901760
  %v508 = vsub.f32 %v174, %v507
  %509 = vmatmul.f32.gmra.mxu0 %v508
  %v510 = vpop.f32.mrf.mxu0
  %v511 = vadd.f32 %v411, %v510
  %v512 = vand.u32 %v177, 4294901760
  %v513 = vsub.f32 %v177, %v512
  %514 = vmatmul.f32.gmra.mxu0 %v513
  %v515 = vpop.f32.mrf.mxu0
  %v516 = vadd.f32 %v415, %v515
  %517 = vdwg.mxu0
  %518 = vmatpush.msra.mxu0 0.0
  %519 = vmatpush.msra.mxu0 0.0
  %520 = vmatpush.msra.mxu0 0.0
  %521 = vmatpush.msra.mxu0 0.0
  %522 = vmatpush.msra.mxu0 0.0
  %523 = vmatpush.msra.mxu0 0.0
  %524 = vmatpush.msra.mxu0 0.0
  %525 = vmatpush.msra.mxu0 0.0
  %526 = vmatpush.msra.mxu0 0.0
  %527 = vmatpush.msra.mxu0 0.0
  %528 = vmatpush.msra.mxu0 0.0
  %529 = vmatpush.msra.mxu0 0.0
  %530 = vmatpush.msra.mxu0 0.0
  %531 = vmatpush.msra.mxu0 0.0
  %v532 = vand.u32 %v129, 4294901760
  %533 = vmatpush.msra.mxu0 %v532
  %v534 = vand.u32 %v128, 4294901760
  %535 = vmatpush.msra.mxu0 %v534
  %v536 = vand.u32 %v132, 4294901760
  %v537 = vsub.f32 %v132, %v536
  %v538 = vand.u32 %v537, 4294901760
  %539 = vmatmul.f32.gmra.mxu0 %v538
  %v540 = vpop.f32.mrf.mxu0
  %v541 = vadd.f32 %v441, %v540
  %v542 = vand.u32 %v135, 4294901760
  %v543 = vsub.f32 %v135, %v542
  %v544 = vand.u32 %v543, 4294901760
  %545 = vmatmul.f32.gmra.mxu0 %v544
  %v546 = vpop.f32.mrf.mxu0
  %v547 = vadd.f32 %v446, %v546
  %v548 = vand.u32 %v138, 4294901760
  %v549 = vsub.f32 %v138, %v548
  %v550 = vand.u32 %v549, 4294901760
  %551 = vmatmul.f32.gmra.mxu0 %v550
  %v552 = vpop.f32.mrf.mxu0
  %v553 = vadd.f32 %v451, %v552
  %v554 = vand.u32 %v141, 4294901760
  %v555 = vsub.f32 %v141, %v554
  %v556 = vand.u32 %v555, 4294901760
  %557 = vmatmul.f32.gmra.mxu0 %v556
  %v558 = vpop.f32.mrf.mxu0
  %v559 = vadd.f32 %v456, %v558
  %v560 = vand.u32 %v144, 4294901760
  %v561 = vsub.f32 %v144, %v560
  %v562 = vand.u32 %v561, 4294901760
  %563 = vmatmul.f32.gmra.mxu0 %v562
  %v564 = vpop.f32.mrf.mxu0
  %v565 = vadd.f32 %v461, %v564
  %v566 = vand.u32 %v147, 4294901760
  %v567 = vsub.f32 %v147, %v566
  %v568 = vand.u32 %v567, 4294901760
  %569 = vmatmul.f32.gmra.mxu0 %v568
  %v570 = vpop.f32.mrf.mxu0
  %v571 = vadd.f32 %v466, %v570
  %v572 = vand.u32 %v150, 4294901760
  %v573 = vsub.f32 %v150, %v572
  %v574 = vand.u32 %v573, 4294901760
  %575 = vmatmul.f32.gmra.mxu0 %v574
  %v576 = vpop.f32.mrf.mxu0
  %v577 = vadd.f32 %v471, %v576
  %v578 = vand.u32 %v153, 4294901760
  %v579 = vsub.f32 %v153, %v578
  %v580 = vand.u32 %v579, 4294901760
  %581 = vmatmul.f32.gmra.mxu0 %v580
  %v582 = vpop.f32.mrf.mxu0
  %v583 = vadd.f32 %v476, %v582
  %v584 = vand.u32 %v156, 4294901760
  %v585 = vsub.f32 %v156, %v584
  %v586 = vand.u32 %v585, 4294901760
  %587 = vmatmul.f32.gmra.mxu0 %v586
  %v588 = vpop.f32.mrf.mxu0
  %v589 = vadd.f32 %v481, %v588
  %v590 = vand.u32 %v159, 4294901760
  %v591 = vsub.f32 %v159, %v590
  %v592 = vand.u32 %v591, 4294901760
  %593 = vmatmul.f32.gmra.mxu0 %v592
  %v594 = vpop.f32.mrf.mxu0
  %v595 = vadd.f32 %v486, %v594
  %v596 = vand.u32 %v162, 4294901760
  %v597 = vsub.f32 %v162, %v596
  %v598 = vand.u32 %v597, 4294901760
  %599 = vmatmul.f32.gmra.mxu0 %v598
  %v600 = vpop.f32.mrf.mxu0
  %v601 = vadd.f32 %v491, %v600
  %v602 = vand.u32 %v165, 4294901760
  %v603 = vsub.f32 %v165, %v602
  %v604 = vand.u32 %v603, 4294901760
  %605 = vmatmul.f32.gmra.mxu0 %v604
  %v606 = vpop.f32.mrf.mxu0
  %v607 = vadd.f32 %v496, %v606
  %v608 = vand.u32 %v168, 4294901760
  %v609 = vsub.f32 %v168, %v608
  %v610 = vand.u32 %v609, 4294901760
  %611 = vmatmul.f32.gmra.mxu0 %v610
  %v612 = vpop.f32.mrf.mxu0
  %v613 = vadd.f32 %v501, %v612
  %v614 = vand.u32 %v171, 4294901760
  %v615 = vsub.f32 %v171, %v614
  %v616 = vand.u32 %v615, 4294901760
  %617 = vmatmul.f32.gmra.mxu0 %v616
  %v618 = vpop.f32.mrf.mxu0
  %v619 = vadd.f32 %v506, %v618
  %v620 = vand.u32 %v174, 4294901760
  %v621 = vsub.f32 %v174, %v620
  %v622 = vand.u32 %v621, 4294901760
  %623 = vmatmul.f32.gmra.mxu0 %v622
  %v624 = vpop.f32.mrf.mxu0
  %v625 = vadd.f32 %v511, %v624
  %v626 = vand.u32 %v177, 4294901760
  %v627 = vsub.f32 %v177, %v626
  %v628 = vand.u32 %v627, 4294901760
  %629 = vmatmul.f32.gmra.mxu0 %v628
  %v630 = vpop.f32.mrf.mxu0
  %v631 = vadd.f32 %v516, %v630
  %632 = vdwg.mxu0
  %633 = vmatpush.msra.mxu0 0.0
  %634 = vmatpush.msra.mxu0 0.0
  %635 = vmatpush.msra.mxu0 0.0
  %636 = vmatpush.msra.mxu0 0.0
  %637 = vmatpush.msra.mxu0 0.0
  %638 = vmatpush.msra.mxu0 0.0
  %639 = vmatpush.msra.mxu0 0.0
  %640 = vmatpush.msra.mxu0 0.0
  %641 = vmatpush.msra.mxu0 0.0
  %642 = vmatpush.msra.mxu0 0.0
  %643 = vmatpush.msra.mxu0 0.0
  %644 = vmatpush.msra.mxu0 0.0
  %645 = vmatpush.msra.mxu0 0.0
  %646 = vmatpush.msra.mxu0 0.0
  %v647 = vand.u32 %v129, 4294901760
  %v648 = vsub.f32 %v129, %v647
  %v649 = vand.u32 %v648, 4294901760
  %650 = vmatpush.msra.mxu0 %v649
  %v651 = vand.u32 %v128, 4294901760
  %v652 = vsub.f32 %v128, %v651
  %v653 = vand.u32 %v652, 4294901760
  %654 = vmatpush.msra.mxu0 %v653
  %v655 = vand.u32 %v132, 4294901760
  %656 = vmatmul.f32.gmra.mxu0 %v655
  %v657 = vpop.f32.mrf.mxu0
  %v658 = vadd.f32 %v541, %v657
  %v659 = vand.u32 %v135, 4294901760
  %660 = vmatmul.f32.gmra.mxu0 %v659
  %v661 = vpop.f32.mrf.mxu0
  %v662 = vadd.f32 %v547, %v661
  %v663 = vand.u32 %v138, 4294901760
  %664 = vmatmul.f32.gmra.mxu0 %v663
  %v665 = vpop.f32.mrf.mxu0
  %v666 = vadd.f32 %v553, %v665
  %v667 = vand.u32 %v141, 4294901760
  %668 = vmatmul.f32.gmra.mxu0 %v667
  %v669 = vpop.f32.mrf.mxu0
  %v670 = vadd.f32 %v559, %v669
  %v671 = vand.u32 %v144, 4294901760
  %672 = vmatmul.f32.gmra.mxu0 %v671
  %v673 = vpop.f32.mrf.mxu0
  %v674 = vadd.f32 %v565, %v673
  %v675 = vand.u32 %v147, 4294901760
  %676 = vmatmul.f32.gmra.mxu0 %v675
  %v677 = vpop.f32.mrf.mxu0
  %v678 = vadd.f32 %v571, %v677
  %v679 = vand.u32 %v150, 4294901760
  %680 = vmatmul.f32.gmra.mxu0 %v679
  %v681 = vpop.f32.mrf.mxu0
  %v682 = vadd.f32 %v577, %v681
  %v683 = vand.u32 %v153, 4294901760
  %684 = vmatmul.f32.gmra.mxu0 %v683
  %v685 = vpop.f32.mrf.mxu0
  %v686 = vadd.f32 %v583, %v685
  %v687 = vand.u32 %v156, 4294901760
  %688 = vmatmul.f32.gmra.mxu0 %v687
  %v689 = vpop.f32.mrf.mxu0
  %v690 = vadd.f32 %v589, %v689
  %v691 = vand.u32 %v159, 4294901760
  %692 = vmatmul.f32.gmra.mxu0 %v691
  %v693 = vpop.f32.mrf.mxu0
  %v694 = vadd.f32 %v595, %v693
  %v695 = vand.u32 %v162, 4294901760
  %696 = vmatmul.f32.gmra.mxu0 %v695
  %v697 = vpop.f32.mrf.mxu0
  %v698 = vadd.f32 %v601, %v697
  %v699 = vand.u32 %v165, 4294901760
  %700 = vmatmul.f32.gmra.mxu0 %v699
  %v701 = vpop.f32.mrf.mxu0
  %v702 = vadd.f32 %v607, %v701
  %v703 = vand.u32 %v168, 4294901760
  %704 = vmatmul.f32.gmra.mxu0 %v703
  %v705 = vpop.f32.mrf.mxu0
  %v706 = vadd.f32 %v613, %v705
  %v707 = vand.u32 %v171, 4294901760
  %708 = vmatmul.f32.gmra.mxu0 %v707
  %v709 = vpop.f32.mrf.mxu0
  %v710 = vadd.f32 %v619, %v709
  %v711 = vand.u32 %v174, 4294901760
  %712 = vmatmul.f32.gmra.mxu0 %v711
  %v713 = vpop.f32.mrf.mxu0
  %v714 = vadd.f32 %v625, %v713
  %v715 = vand.u32 %v177, 4294901760
  %716 = vmatmul.f32.gmra.mxu0 %v715
  %v717 = vpop.f32.mrf.mxu0
  %v718 = vadd.f32 %v631, %v717
  %719 = vdwg.mxu0
  %720 = vmatpush.msra.mxu0 0.0
  %721 = vmatpush.msra.mxu0 0.0
  %722 = vmatpush.msra.mxu0 0.0
  %723 = vmatpush.msra.mxu0 0.0
  %724 = vmatpush.msra.mxu0 0.0
  %725 = vmatpush.msra.mxu0 0.0
  %726 = vmatpush.msra.mxu0 0.0
  %727 = vmatpush.msra.mxu0 0.0
  %728 = vmatpush.msra.mxu0 0.0
  %729 = vmatpush.msra.mxu0 0.0
  %730 = vmatpush.msra.mxu0 0.0
  %731 = vmatpush.msra.mxu0 0.0
  %732 = vmatpush.msra.mxu0 0.0
  %733 = vmatpush.msra.mxu0 0.0
  %v734 = vand.u32 %v129, 4294901760
  %735 = vmatpush.msra.mxu0 %v734
  %v736 = vand.u32 %v128, 4294901760
  %737 = vmatpush.msra.mxu0 %v736
  %v738 = vand.u32 %v132, 4294901760
  %739 = vmatmul.f32.gmra.mxu0 %v738
  %v740 = vpop.f32.mrf.mxu0
  %v741 = vadd.f32 %v658, %v740
  %v742 = vand.u32 %v135, 4294901760
  %743 = vmatmul.f32.gmra.mxu0 %v742
  %v744 = vpop.f32.mrf.mxu0
  %v745 = vadd.f32 %v662, %v744
  %v746 = vand.u32 %v138, 4294901760
  %747 = vmatmul.f32.gmra.mxu0 %v746
  %v748 = vpop.f32.mrf.mxu0
  %v749 = vadd.f32 %v666, %v748
  %v750 = vand.u32 %v141, 4294901760
  %751 = vmatmul.f32.gmra.mxu0 %v750
  %v752 = vpop.f32.mrf.mxu0
  %v753 = vadd.f32 %v670, %v752
  %v754 = vand.u32 %v144, 4294901760
  %755 = vmatmul.f32.gmra.mxu0 %v754
  %v756 = vpop.f32.mrf.mxu0
  %v757 = vadd.f32 %v674, %v756
  %v758 = vand.u32 %v147, 4294901760
  %759 = vmatmul.f32.gmra.mxu0 %v758
  %v760 = vpop.f32.mrf.mxu0
  %v761 = vadd.f32 %v678, %v760
  %v762 = vand.u32 %v150, 4294901760
  %763 = vmatmul.f32.gmra.mxu0 %v762
  %v764 = vpop.f32.mrf.mxu0
  %v765 = vadd.f32 %v682, %v764
  %v766 = vand.u32 %v153, 4294901760
  %767 = vmatmul.f32.gmra.mxu0 %v766
  %v768 = vpop.f32.mrf.mxu0
  %v769 = vadd.f32 %v686, %v768
  %v770 = vand.u32 %v156, 4294901760
  %771 = vmatmul.f32.gmra.mxu0 %v770
  %v772 = vpop.f32.mrf.mxu0
  %v773 = vadd.f32 %v690, %v772
  %v774 = vand.u32 %v159, 4294901760
  %775 = vmatmul.f32.gmra.mxu0 %v774
  %v776 = vpop.f32.mrf.mxu0
  %v777 = vadd.f32 %v694, %v776
  %v778 = vand.u32 %v162, 4294901760
  %779 = vmatmul.f32.gmra.mxu0 %v778
  %v780 = vpop.f32.mrf.mxu0
  %v781 = vadd.f32 %v698, %v780
  %v782 = vand.u32 %v165, 4294901760
  %783 = vmatmul.f32.gmra.mxu0 %v782
  %v784 = vpop.f32.mrf.mxu0
  %v785 = vadd.f32 %v702, %v784
  %v786 = vand.u32 %v168, 4294901760
  %787 = vmatmul.f32.gmra.mxu0 %v786
  %v788 = vpop.f32.mrf.mxu0
  %v789 = vadd.f32 %v706, %v788
  %v790 = vand.u32 %v171, 4294901760
  %791 = vmatmul.f32.gmra.mxu0 %v790
  %v792 = vpop.f32.mrf.mxu0
  %v793 = vadd.f32 %v710, %v792
  %v794 = vand.u32 %v174, 4294901760
  %795 = vmatmul.f32.gmra.mxu0 %v794
  %v796 = vpop.f32.mrf.mxu0
  %v797 = vadd.f32 %v714, %v796
  %v798 = vand.u32 %v177, 4294901760
  %799 = vmatmul.f32.gmra.mxu0 %v798
  %v800 = vpop.f32.mrf.mxu0
  %v801 = vadd.f32 %v718, %v800
  %802 = vdwg.mxu0
  %v803 = vld [vmem:[%s1] sm:$0xff]
  %v804 = vld [vmem:[%s1 + $0x8] sm:$0xff]
  %v805 = vld [vmem:[%s1 + $0x10] sm:$0xff]
  %v806 = vld [vmem:[%s1 + $0x18] sm:$0xff]
  %v807 = vld [vmem:[%s1 + $0x20] sm:$0xff]
  %v808 = vld [vmem:[%s1 + $0x28] sm:$0xff]
  %v809 = vld [vmem:[%s1 + $0x30] sm:$0xff]
  %v810 = vld [vmem:[%s1 + $0x38] sm:$0xff]
  %v811 = vld [vmem:[%s1 + $0x40] sm:$0xff]
  %v812 = vld [vmem:[%s1 + $0x48] sm:$0xff]
  %v813 = vld [vmem:[%s1 + $0x50] sm:$0xff]
  %v814 = vld [vmem:[%s1 + $0x58] sm:$0xff]
  %v815 = vld [vmem:[%s1 + $0x60] sm:$0xff]
  %v816 = vld [vmem:[%s1 + $0x68] sm:$0xff]
  %v817 = vld [vmem:[%s1 + $0x70] sm:$0xff]
  %v818 = vld [vmem:[%s1 + $0x78] sm:$0xff]
  %v819 = vmul.f32 %v741, %v803
  %v820 = vmul.f32 %v745, %v804
  %v821 = vmul.f32 %v749, %v805
  %v822 = vmul.f32 %v753, %v806
  %v823 = vmul.f32 %v757, %v807
  %v824 = vmul.f32 %v761, %v808
  %v825 = vmul.f32 %v765, %v809
  %v826 = vmul.f32 %v769, %v810
  %v827 = vmul.f32 %v773, %v811
  %v828 = vmul.f32 %v777, %v812
  %v829 = vmul.f32 %v781, %v813
  %v830 = vmul.f32 %v785, %v814
  %v831 = vmul.f32 %v789, %v815
  %v832 = vmul.f32 %v793, %v816
  %v833 = vmul.f32 %v797, %v817
  %v834 = vmul.f32 %v801, %v818
  %851 = vrot.lane.b32.xlu0 %v741, 113
  %v852 = vpop.permute.xlu0 %851
  %853 = vrot.lane.b32.xlu0 %v745, 113
  %v854 = vpop.permute.xlu0 %853
  %855 = vrot.lane.b32.xlu0 %v749, 113
  %v856 = vpop.permute.xlu0 %855
  %857 = vrot.lane.b32.xlu0 %v753, 113
  %v858 = vpop.permute.xlu0 %857
  %859 = vrot.lane.b32.xlu0 %v757, 113
  %v860 = vpop.permute.xlu0 %859
  %861 = vrot.lane.b32.xlu0 %v761, 113
  %v862 = vpop.permute.xlu0 %861
  %863 = vrot.lane.b32.xlu0 %v765, 113
  %v864 = vpop.permute.xlu0 %863
  %865 = vrot.lane.b32.xlu0 %v769, 113
  %v866 = vpop.permute.xlu0 %865
  %867 = vrot.lane.b32.xlu0 %v773, 113
  %v868 = vpop.permute.xlu0 %867
  %869 = vrot.lane.b32.xlu0 %v777, 113
  %v870 = vpop.permute.xlu0 %869
  %871 = vrot.lane.b32.xlu0 %v781, 113
  %v872 = vpop.permute.xlu0 %871
  %873 = vrot.lane.b32.xlu0 %v785, 113
  %v874 = vpop.permute.xlu0 %873
  %875 = vrot.lane.b32.xlu0 %v789, 113
  %v876 = vpop.permute.xlu0 %875
  %877 = vrot.lane.b32.xlu0 %v793, 113
  %v878 = vpop.permute.xlu0 %877
  %879 = vrot.lane.b32.xlu0 %v797, 113
  %v880 = vpop.permute.xlu0 %879
  %881 = vrot.lane.b32.xlu0 %v801, 113
  %v882 = vpop.permute.xlu0 %881
  %v899 = vadd.f32 %v819, %v852
  %v900 = vadd.f32 %v820, %v854
  %v901 = vadd.f32 %v821, %v856
  %v902 = vadd.f32 %v822, %v858
  %v903 = vadd.f32 %v823, %v860
  %v904 = vadd.f32 %v824, %v862
  %v905 = vadd.f32 %v825, %v864
  %v906 = vadd.f32 %v826, %v866
  %v907 = vadd.f32 %v827, %v868
  %v908 = vadd.f32 %v828, %v870
  %v909 = vadd.f32 %v829, %v872
  %v910 = vadd.f32 %v830, %v874
  %v911 = vadd.f32 %v831, %v876
  %v912 = vadd.f32 %v832, %v878
  %v913 = vadd.f32 %v833, %v880
  %v914 = vadd.f32 %v834, %v882
  %vm915 = vcmask 121856
  %916 = vst.msk [vmem:[%s3] sm:$0xff] %vm915, %v899
  %917 = vst.msk [vmem:[%s3 + $0x8] sm:$0xff] %vm915, %v900
  %918 = vst.msk [vmem:[%s3 + $0x10] sm:$0xff] %vm915, %v901
  %919 = vst.msk [vmem:[%s3 + $0x18] sm:$0xff] %vm915, %v902
  %920 = vst.msk [vmem:[%s3 + $0x20] sm:$0xff] %vm915, %v903
  %921 = vst.msk [vmem:[%s3 + $0x28] sm:$0xff] %vm915, %v904
  %922 = vst.msk [vmem:[%s3 + $0x30] sm:$0xff] %vm915, %v905
  %923 = vst.msk [vmem:[%s3 + $0x38] sm:$0xff] %vm915, %v906
  %924 = vst.msk [vmem:[%s3 + $0x40] sm:$0xff] %vm915, %v907
  %925 = vst.msk [vmem:[%s3 + $0x48] sm:$0xff] %vm915, %v908
  %926 = vst.msk [vmem:[%s3 + $0x50] sm:$0xff] %vm915, %v909
  %927 = vst.msk [vmem:[%s3 + $0x58] sm:$0xff] %vm915, %v910
  %928 = vst.msk [vmem:[%s3 + $0x60] sm:$0xff] %vm915, %v911
  %929 = vst.msk [vmem:[%s3 + $0x68] sm:$0xff] %vm915, %v912
  %930 = vst.msk [vmem:[%s3 + $0x70] sm:$0xff] %vm915, %v913
  %931 = vst.msk [vmem:[%s3 + $0x78] sm:$0xff] %vm915, %v914
  // Predicated region
  $region14: #{tpu_custom_call.1} parent=0 // pred_check
    _
  $region15: #{tpu_custom_call.1} parent=0 // pred_check_branch
    %933 = sbr.rel (0) target = $region17
  $region16: #{tpu_custom_call.1} parent=0 // pred_region
    _
  $region17: #{tpu_custom_call.1} parent=0 // pred_fallthru
    _
  // Predicated region
  $region18: #{tpu_custom_call.1} parent=0 // pred_check
    _
  $region19: #{tpu_custom_call.1} parent=0 // pred_check_branch
    %935 = sbr.rel (0) target = $region21
  $region20: #{tpu_custom_call.1} parent=0 // pred_region
    _
  $region21: #{tpu_custom_call.1} parent=0 // pred_fallthru
    _

</llo_original>
